<compile_context>
chip_gen: v6e
topology: v6e:2x2x1
jax: 0.10.0
libtpu: 0.0.40
codegen_flags: <defaults>
</compile_context>

<pallas_src>
import jax
import jax.numpy as jnp
from jax.experimental import pallas as pl
from jax.experimental.pallas import tpu as pltpu


def _round_up(x, m):
    return (x + m - 1) // m * m


def _fusion_kernel(w_ref, pred_ref, act_ref, out_ref, acc_ref):
    i = pl.program_id(1)
    last = pl.num_programs(1) - 1

    @pl.when(i == 0)
    def _init():
        acc_ref[...] = jnp.zeros_like(acc_ref)

    # Feature planes, each (tile_rows, 128): batch spread over sublanes x lanes.
    px, py, pz = pred_ref[0], pred_ref[1], pred_ref[2]
    ax, ay, az = act_ref[0], act_ref[1], act_ref[2]
    a1, b1, c1, d1 = pred_ref[3], pred_ref[4], pred_ref[5], pred_ref[6]
    a2 = act_ref[3]
    b2 = -act_ref[4]
    c2 = -act_ref[5]
    d2 = -act_ref[6]

    # ---- position branch: per-sample sum of |dpos| (VPU, lane-dense) -------
    dpos = jnp.abs(px - ax) + jnp.abs(py - ay) + jnp.abs(pz - az)

    # ---- orientation branch: QME with deferred normalization ---------------
    q2 = a1 * b2 + b1 * a2 + c1 * d2 - d1 * c2
    q3 = a1 * c2 - b1 * d2 + c1 * a2 + d1 * b2
    q4 = a1 * d2 + b1 * c2 - c1 * b2 + d1 * a2
    inv_norm = jax.lax.rsqrt(a1 * a1 + b1 * b1 + c1 * c1 + d1 * d1)
    qme = 2.0 * (jnp.abs(q2) + jnp.abs(q3) + jnp.abs(q4)) * inv_norm

    # Weights (exp(-alpha)/(3B), exp(-beta)/B) were precomputed in the wrapper.
    # Padding samples (pred == act == all-ones) contribute exactly 0: no mask.
    acc_ref[...] += w_ref[0] * dpos + w_ref[1] * qme

    # ---- single final reduction per grid slice ------------------------------
    @pl.when(i == last)
    def _finalize():
        total = jnp.sum(acc_ref[...])
        out_ref[...] = jnp.broadcast_to(total, (1, 1, 1)).astype(out_ref.dtype)


def fusion_criterion_learn_parms(predicted, actual, alpha, beta, *,
                                 tile_rows=1024, num_cores=2):
    """predicted, actual: (B, 7) float32; alpha, beta: (1,) float32 params.

    tile_rows: row-tile size target (1024 default; 2048 is fine on v6e/v7x).
    num_cores: leading "parallel" grid axis size (2 engages both v7x TCs;
               harmless two sequential passes on v5e/v6e).
    """
    B = predicted.shape[0]
    nc = max(int(num_cores), 1)

    # Minimal row count (multiple of 8), then balance tiles across nc slices so
    # padding stays < 8 rows per slice (no rounding rows up to a tile multiple).
    rows_min = _round_up(max(pl.cdiv(B, 128), 1), 8)
    total_tiles = max(pl.cdiv(rows_min, max(int(tile_rows), 8)), 1)
    tiles_per_core = pl.cdiv(total_tiles, nc)
    tile_r = _round_up(pl.cdiv(rows_min, nc * tiles_per_core), 8)
    rows_total = nc * tiles_per_core * tile_r
    bp = rows_total * 128

    def to_slab(x):
        # TODO(synk): ideally the producer emits feature-major (7, B) directly;
        # this transpose+pad is the only extra HBM traffic left.
        xt = jnp.transpose(x.astype(jnp.float32))                 # (7, B)
        # Pad with 1.0 so padded samples (pred == act) contribute exactly 0
        # and rsqrt never sees 0.
        xt = jnp.pad(xt, ((0, 0), (0, bp - B)), constant_values=1.0)
        return xt.reshape(7, rows_total, 128)

    pred_s = to_slab(predicted)
    act_s = to_slab(actual)

    # Fold the learned weights and mean factors into two SMEM scalars.
    alpha32 = alpha.astype(jnp.float32)
    beta32 = beta.astype(jnp.float32)
    w_pos = jnp.exp(-alpha32) * (1.0 / (3.0 * B))
    w_ori = jnp.exp(-beta32) * (1.0 / B)
    weights = jnp.concatenate([w_pos, w_ori]).astype(jnp.float32)   # (2,) SMEM

    # VMEM budget: 2 inputs x 2 buffers x (7, tile_r, 128) f32 + accumulator.
    block_bytes = 7 * tile_r * 128 * 4
    vmem_limit = 4 * block_bytes + tile_r * 128 * 4 + (4 << 20)

    partials = pl.pallas_call(
        _fusion_kernel,
        out_shape=jax.ShapeDtypeStruct((nc, 1, 1), jnp.float32),
        grid_spec=pltpu.PrefetchScalarGridSpec(
            num_scalar_prefetch=0,
            grid=(nc, tiles_per_core),
            in_specs=[
                pl.BlockSpec(memory_space=pltpu.SMEM),                 # weights
                pl.BlockSpec((7, tile_r, 128),
                             lambda c, i: (0, c * tiles_per_core + i, 0)),
                pl.BlockSpec((7, tile_r, 128),
                             lambda c, i: (0, c * tiles_per_core + i, 0)),
            ],
            out_specs=pl.BlockSpec((1, 1, 1), lambda c, i: (c, 0, 0)),
            scratch_shapes=[pltpu.VMEM((tile_r, 128), jnp.float32)],
        ),
        # Leading axis "parallel" (per-core partials on v7x), row-tile axis is
        # the accumulator ("arbitrary") axis.
        compiler_params=pltpu.CompilerParams(
            dimension_semantics=("parallel", "arbitrary"),
            vmem_limit_bytes=int(vmem_limit),
        ),
    )(weights, pred_s, act_s)

    # Learned offsets applied once, outside the per-slice partials.
    return jnp.sum(partials) + alpha32[0] + beta32[0]


def _reference(predicted, actual, alpha, beta):
    """Pure-JAX reference mirroring the PyTorch module (float32)."""
    a = alpha[0]
    b = beta[0]
    pos_l1 = jnp.mean(jnp.abs(predicted[:, :3] - actual[:, :3]))
    q = predicted[:, 3:]
    qn = q / jnp.linalg.norm(q, axis=1, keepdims=True)
    a1, b1, c1, d1 = qn[:, 0], qn[:, 1], qn[:, 2], qn[:, 3]
    conj = jnp.array([1.0, -1.0, -1.0, -1.0], jnp.float32)
    t = actual[:, 3:] * conj
    a2, b2, c2, d2 = t[:, 0], t[:, 1], t[:, 2], t[:, 3]
    q2 = a1 * b2 + b1 * a2 + c1 * d2 - d1 * c2
    q3 = a1 * c2 - b1 * d2 + c1 * a2 + d1 * b2
    q4 = a1 * d2 + b1 * c2 - c1 * b2 + d1 * a2
    qme = 2.0 * (jnp.abs(q2) + jnp.abs(q3) + jnp.abs(q4))
    ori = jnp.mean(qme)
    return jnp.exp(-a) * pos_l1 + a + jnp.exp(-b) * ori + b


if __name__ == "__main__":
    key = jax.random.PRNGKey(0)
    k1, k2, k3, k4 = jax.random.split(key, 4)

    # Parameters from __init__: alpha=0.0, beta=-3.0 (deterministic).
    alpha = jnp.array([0.0], dtype=jnp.float32)
    beta = jnp.array([-3.0], dtype=jnp.float32)

    # Small shape consistent with the module's forward: (batch, 7).
    B = 8
    predicted = jax.random.normal(k1, (B, 7), dtype=jnp.float32)
    actual = jax.random.normal(k2, (B, 7), dtype=jnp.float32)

    out = fusion_criterion_learn_parms(predicted, actual, alpha, beta)
    out = jax.block_until_ready(out)
    ref = _reference(predicted, actual, alpha, beta)
    assert jnp.allclose(out, ref, rtol=1e-4, atol=1e-4), (out, ref)

    # Exercise the multi-step accumulator, identity padding and the per-slice
    # partial-sum path (grid = (2, 3) with tile_rows=8).
    B2 = 5000
    predicted2 = jax.random.normal(k3, (B2, 7), dtype=jnp.float32)
    actual2 = jax.random.normal(k4, (B2, 7), dtype=jnp.float32)
    out2 = fusion_criterion_learn_parms(predicted2, actual2, alpha, beta,
                                        tile_rows=8)
    out2 = jax.block_until_ready(out2)
    ref2 = _reference(predicted2, actual2, alpha, beta)
    assert jnp.allclose(out2, ref2, rtol=1e-4, atol=1e-4), (out2, ref2)

    print("KERNEL_OK")
</pallas_src>

<mosaic_0001>
module attributes {stable_mosaic.version = 11 : i64} {
  func.func @_fusion_kernel(%arg0: i32, %arg1: i32, %arg2: memref<2xf32, #tpu.memory_space<smem>>, %arg3: memref<7x8x128xf32, #tpu.memory_space<vmem>>, %arg4: memref<7x8x128xf32, #tpu.memory_space<vmem>>, %arg5: memref<1x1x1xf32, #tpu.memory_space<vmem>>, %arg6: memref<8x128xf32, #tpu.memory_space<vmem>>) attributes {dimension_semantics = [#tpu.dimension_semantics<parallel>, #tpu.dimension_semantics<arbitrary>], iteration_bounds = array<i64: 2, 1>, scalar_prefetch = 0 : i64, scratch_operands = 1 : i64, tpu.core_type = #tpu.core_type<tc>, window_params = [{transform_indices = @transform_0, window_bounds = array<i64: 2>}, {transform_indices = @transform_1, window_bounds = array<i64: 7, 8, 128>}, {transform_indices = @transform_2, window_bounds = array<i64: 7, 8, 128>}, {transform_indices = @transform_3, window_bounds = array<i64: 1, 1, 1>}]} {
    %c0_i32 = arith.constant 0 : i32
    %0 = arith.cmpi eq, %arg1, %c0_i32 : i32
    %1 = arith.extui %0 : i1 to i32
    %c0_i32_0 = arith.constant 0 : i32
    %2 = arith.cmpi ne, %1, %c0_i32_0 : i32
    scf.if %2 {
      %cst_47 = arith.constant 0.000000e+00 : f32
      %95 = vector.broadcast %cst_47 : f32 to vector<8x128xf32>
      %c0_48 = arith.constant 0 : index
      %c0_49 = arith.constant 0 : index
      %96 = vector.load %arg6[%c0_48, %c0_49] : memref<8x128xf32, #tpu.memory_space<vmem>>, vector<8x128xf32>
      tpu.vector_store %arg6[%c0_48, %c0_49], %95 {strides = array<i32>} : memref<8x128xf32, #tpu.memory_space<vmem>>, vector<8x128xf32>,
    } else {
    }
    %c0 = arith.constant 0 : index
    %c0_1 = arith.constant 0 : index
    %c0_2 = arith.constant 0 : index
    %3 = vector.load %arg3[%c0, %c0_1, %c0_2] : memref<7x8x128xf32, #tpu.memory_space<vmem>>, vector<1x8x128xf32>
    %4 = vector.shape_cast %3 : vector<1x8x128xf32> to vector<8x128xf32>
    %c1 = arith.constant 1 : index
    %c0_3 = arith.constant 0 : index
    %c0_4 = arith.constant 0 : index
    %5 = vector.load %arg3[%c1, %c0_3, %c0_4] : memref<7x8x128xf32, #tpu.memory_space<vmem>>, vector<1x8x128xf32>
    %6 = vector.shape_cast %5 : vector<1x8x128xf32> to vector<8x128xf32>
    %c2 = arith.constant 2 : index
    %c0_5 = arith.constant 0 : index
    %c0_6 = arith.constant 0 : index
    %7 = vector.load %arg3[%c2, %c0_5, %c0_6] : memref<7x8x128xf32, #tpu.memory_space<vmem>>, vector<1x8x128xf32>
    %8 = vector.shape_cast %7 : vector<1x8x128xf32> to vector<8x128xf32>
    %c0_7 = arith.constant 0 : index
    %c0_8 = arith.constant 0 : index
    %c0_9 = arith.constant 0 : index
    %9 = vector.load %arg4[%c0_7, %c0_8, %c0_9] : memref<7x8x128xf32, #tpu.memory_space<vmem>>, vector<1x8x128xf32>
    %10 = vector.shape_cast %9 : vector<1x8x128xf32> to vector<8x128xf32>
    %c1_10 = arith.constant 1 : index
    %c0_11 = arith.constant 0 : index
    %c0_12 = arith.constant 0 : index
    %11 = vector.load %arg4[%c1_10, %c0_11, %c0_12] : memref<7x8x128xf32, #tpu.memory_space<vmem>>, vector<1x8x128xf32>
    %12 = vector.shape_cast %11 : vector<1x8x128xf32> to vector<8x128xf32>
    %c2_13 = arith.constant 2 : index
    %c0_14 = arith.constant 0 : index
    %c0_15 = arith.constant 0 : index
    %13 = vector.load %arg4[%c2_13, %c0_14, %c0_15] : memref<7x8x128xf32, #tpu.memory_space<vmem>>, vector<1x8x128xf32>
    %14 = vector.shape_cast %13 : vector<1x8x128xf32> to vector<8x128xf32>
    %c3 = arith.constant 3 : index
    %c0_16 = arith.constant 0 : index
    %c0_17 = arith.constant 0 : index
    %15 = vector.load %arg3[%c3, %c0_16, %c0_17] : memref<7x8x128xf32, #tpu.memory_space<vmem>>, vector<1x8x128xf32>
    %16 = vector.shape_cast %15 : vector<1x8x128xf32> to vector<8x128xf32>
    %c4 = arith.constant 4 : index
    %c0_18 = arith.constant 0 : index
    %c0_19 = arith.constant 0 : index
    %17 = vector.load %arg3[%c4, %c0_18, %c0_19] : memref<7x8x128xf32, #tpu.memory_space<vmem>>, vector<1x8x128xf32>
    %18 = vector.shape_cast %17 : vector<1x8x128xf32> to vector<8x128xf32>
    %c5 = arith.constant 5 : index
    %c0_20 = arith.constant 0 : index
    %c0_21 = arith.constant 0 : index
    %19 = vector.load %arg3[%c5, %c0_20, %c0_21] : memref<7x8x128xf32, #tpu.memory_space<vmem>>, vector<1x8x128xf32>
    %20 = vector.shape_cast %19 : vector<1x8x128xf32> to vector<8x128xf32>
    %c6 = arith.constant 6 : index
    %c0_22 = arith.constant 0 : index
    %c0_23 = arith.constant 0 : index
    %21 = vector.load %arg3[%c6, %c0_22, %c0_23] : memref<7x8x128xf32, #tpu.memory_space<vmem>>, vector<1x8x128xf32>
    %22 = vector.shape_cast %21 : vector<1x8x128xf32> to vector<8x128xf32>
    %c3_24 = arith.constant 3 : index
    %c0_25 = arith.constant 0 : index
    %c0_26 = arith.constant 0 : index
    %23 = vector.load %arg4[%c3_24, %c0_25, %c0_26] : memref<7x8x128xf32, #tpu.memory_space<vmem>>, vector<1x8x128xf32>
    %24 = vector.shape_cast %23 : vector<1x8x128xf32> to vector<8x128xf32>
    %c4_27 = arith.constant 4 : index
    %c0_28 = arith.constant 0 : index
    %c0_29 = arith.constant 0 : index
    %25 = vector.load %arg4[%c4_27, %c0_28, %c0_29] : memref<7x8x128xf32, #tpu.memory_space<vmem>>, vector<1x8x128xf32>
    %26 = vector.shape_cast %25 : vector<1x8x128xf32> to vector<8x128xf32>
    %cst = arith.constant 0.000000e+00 : f32
    %27 = vector.broadcast %cst : f32 to vector<8x128xf32>
    %28 = arith.subf %27, %26 : vector<8x128xf32>
    %c5_30 = arith.constant 5 : index
    %c0_31 = arith.constant 0 : index
    %c0_32 = arith.constant 0 : index
    %29 = vector.load %arg4[%c5_30, %c0_31, %c0_32] : memref<7x8x128xf32, #tpu.memory_space<vmem>>, vector<1x8x128xf32>
    %30 = vector.shape_cast %29 : vector<1x8x128xf32> to vector<8x128xf32>
    %cst_33 = arith.constant 0.000000e+00 : f32
    %31 = vector.broadcast %cst_33 : f32 to vector<8x128xf32>
    %32 = arith.subf %31, %30 : vector<8x128xf32>
    %c6_34 = arith.constant 6 : index
    %c0_35 = arith.constant 0 : index
    %c0_36 = arith.constant 0 : index
    %33 = vector.load %arg4[%c6_34, %c0_35, %c0_36] : memref<7x8x128xf32, #tpu.memory_space<vmem>>, vector<1x8x128xf32>
    %34 = vector.shape_cast %33 : vector<1x8x128xf32> to vector<8x128xf32>
    %cst_37 = arith.constant 0.000000e+00 : f32
    %35 = vector.broadcast %cst_37 : f32 to vector<8x128xf32>
    %36 = arith.subf %35, %34 : vector<8x128xf32>
    %37 = arith.subf %4, %10 : vector<8x128xf32>
    %38 = math.absf %37 : vector<8x128xf32>
    %39 = arith.subf %6, %12 : vector<8x128xf32>
    %40 = math.absf %39 : vector<8x128xf32>
    %41 = arith.addf %38, %40 : vector<8x128xf32>
    %42 = arith.subf %8, %14 : vector<8x128xf32>
    %43 = math.absf %42 : vector<8x128xf32>
    %44 = arith.addf %41, %43 : vector<8x128xf32>
    %45 = arith.mulf %16, %28 : vector<8x128xf32>
    %46 = arith.mulf %18, %24 : vector<8x128xf32>
    %47 = arith.addf %45, %46 : vector<8x128xf32>
    %48 = arith.mulf %20, %36 : vector<8x128xf32>
    %49 = arith.addf %47, %48 : vector<8x128xf32>
    %50 = arith.mulf %22, %32 : vector<8x128xf32>
    %51 = arith.subf %49, %50 : vector<8x128xf32>
    %52 = arith.mulf %16, %32 : vector<8x128xf32>
    %53 = arith.mulf %18, %36 : vector<8x128xf32>
    %54 = arith.subf %52, %53 : vector<8x128xf32>
    %55 = arith.mulf %20, %24 : vector<8x128xf32>
    %56 = arith.addf %54, %55 : vector<8x128xf32>
    %57 = arith.mulf %22, %28 : vector<8x128xf32>
    %58 = arith.addf %56, %57 : vector<8x128xf32>
    %59 = arith.mulf %16, %36 : vector<8x128xf32>
    %60 = arith.mulf %18, %32 : vector<8x128xf32>
    %61 = arith.addf %59, %60 : vector<8x128xf32>
    %62 = arith.mulf %20, %28 : vector<8x128xf32>
    %63 = arith.subf %61, %62 : vector<8x128xf32>
    %64 = arith.mulf %22, %24 : vector<8x128xf32>
    %65 = arith.addf %63, %64 : vector<8x128xf32>
    %66 = arith.mulf %16, %16 : vector<8x128xf32>
    %67 = arith.mulf %18, %18 : vector<8x128xf32>
    %68 = arith.addf %66, %67 : vector<8x128xf32>
    %69 = arith.mulf %20, %20 : vector<8x128xf32>
    %70 = arith.addf %68, %69 : vector<8x128xf32>
    %71 = arith.mulf %22, %22 : vector<8x128xf32>
    %72 = arith.addf %70, %71 : vector<8x128xf32>
    %73 = math.rsqrt %72 : vector<8x128xf32>
    %74 = math.absf %51 : vector<8x128xf32>
    %75 = math.absf %58 : vector<8x128xf32>
    %76 = arith.addf %74, %75 : vector<8x128xf32>
    %77 = math.absf %65 : vector<8x128xf32>
    %78 = arith.addf %76, %77 : vector<8x128xf32>
    %cst_38 = arith.constant 2.000000e+00 : f32
    %79 = vector.broadcast %cst_38 : f32 to vector<8x128xf32>
    %80 = arith.mulf %79, %78 : vector<8x128xf32>
    %81 = arith.mulf %80, %73 : vector<8x128xf32>
    %c0_39 = arith.constant 0 : index
    %c0_40 = arith.constant 0 : index
    %82 = vector.load %arg6[%c0_39, %c0_40] : memref<8x128xf32, #tpu.memory_space<vmem>>, vector<8x128xf32>
    %c0_41 = arith.constant 0 : index
    %83 = memref.load %arg2[%c0_41] : memref<2xf32, #tpu.memory_space<smem>>
    %84 = vector.broadcast %83 : f32 to vector<8x128xf32>
    %85 = arith.mulf %84, %44 : vector<8x128xf32>
    %c1_42 = arith.constant 1 : index
    %86 = memref.load %arg2[%c1_42] : memref<2xf32, #tpu.memory_space<smem>>
    %87 = vector.broadcast %86 : f32 to vector<8x128xf32>
    %88 = arith.mulf %87, %81 : vector<8x128xf32>
    %89 = arith.addf %85, %88 : vector<8x128xf32>
    %90 = arith.addf %82, %89 : vector<8x128xf32>
    %c0_43 = arith.constant 0 : index
    %c0_44 = arith.constant 0 : index
    %91 = vector.load %arg6[%c0_43, %c0_44] : memref<8x128xf32, #tpu.memory_space<vmem>>, vector<8x128xf32>
    tpu.vector_store %arg6[%c0_43, %c0_44], %90 {strides = array<i32>} : memref<8x128xf32, #tpu.memory_space<vmem>>, vector<8x128xf32>,
    %c0_i32_45 = arith.constant 0 : i32
    %92 = arith.cmpi eq, %arg1, %c0_i32_45 : i32
    %93 = arith.extui %92 : i1 to i32
    %c0_i32_46 = arith.constant 0 : i32
    %94 = arith.cmpi ne, %93, %c0_i32_46 : i32
    scf.if %94 {
      %c0_47 = arith.constant 0 : index
      %c0_48 = arith.constant 0 : index
      %95 = vector.load %arg6[%c0_47, %c0_48] : memref<8x128xf32, #tpu.memory_space<vmem>>, vector<8x128xf32>
      %96 = vector.shape_cast %95 : vector<8x128xf32> to vector<1x8x128xf32>
      %cst_49 = arith.constant dense<0.000000e+00> : vector<1xf32>
      %97 = vector.multi_reduction <add>, %96, %cst_49 [1, 2] : vector<1x8x128xf32> to vector<1xf32>
      %98 = vector.shape_cast %97 : vector<1xf32> to vector<1x1x1xf32>
      %99 = vector.extract %98[0, 0, 0] : f32 from vector<1x1x1xf32>
      %100 = vector.broadcast %99 : f32 to vector<1x1x1xf32>
      %c0_50 = arith.constant 0 : index
      %c0_51 = arith.constant 0 : index
      %c0_52 = arith.constant 0 : index
      %101 = vector.load %arg5[%c0_50, %c0_51, %c0_52] : memref<1x1x1xf32, #tpu.memory_space<vmem>>, vector<1x1x1xf32>
      tpu.vector_store %arg5[%c0_50, %c0_51, %c0_52], %100 {strides = array<i32>} : memref<1x1x1xf32, #tpu.memory_space<vmem>>, vector<1x1x1xf32>,
    } else {
    }
    return
  }
  func.func @transform_0(%arg0: i32, %arg1: i32) -> i32 {
    %c0_i32 = arith.constant 0 : i32
    %c0_i32_0 = arith.constant 0 : i32
    return %c0_i32 : i32
  }
  func.func @transform_1(%arg0: i32, %arg1: i32) -> (i32, i32, i32) {
    %c1_i32 = arith.constant 1 : i32
    %0 = arith.muli %arg0, %c1_i32 : i32
    %1 = arith.addi %0, %arg1 : i32
    %c0_i32 = arith.constant 0 : i32
    %c0_i32_0 = arith.constant 0 : i32
    %c0_i32_1 = arith.constant 0 : i32
    return %c0_i32, %1, %c0_i32_0 : i32, i32, i32
  }
  func.func @transform_2(%arg0: i32, %arg1: i32) -> (i32, i32, i32) {
    %c1_i32 = arith.constant 1 : i32
    %0 = arith.muli %arg0, %c1_i32 : i32
    %1 = arith.addi %0, %arg1 : i32
    %c0_i32 = arith.constant 0 : i32
    %c0_i32_0 = arith.constant 0 : i32
    %c0_i32_1 = arith.constant 0 : i32
    return %c0_i32, %1, %c0_i32_0 : i32, i32, i32
  }
  func.func @transform_3(%arg0: i32, %arg1: i32) -> (i32, i32, i32) {
    %c0_i32 = arith.constant 0 : i32
    %c0_i32_0 = arith.constant 0 : i32
    %c0_i32_1 = arith.constant 0 : i32
    return %arg0, %c0_i32, %c0_i32_0 : i32, i32, i32
  }
}

</mosaic_0001>

<llo_original>
// kernel: tpu_custom_call.1
$region0: #{tpu_custom_call.1}
  #allocation0 [shape = 'u32[]', space=smem, size = 0x4, offset = 0x4, fixed_abs, tag = 'smem constant byte address 0x4 - core index']
  #allocation1 [shape = 'u32[144,128]{1,0:T(1,128)}', space=vmem, size = 0x12000, scoped, tag = 'internal scratch']
  #allocation2 [shape = 'f32[8,128]{1,0:T(8,128)}', space=vmem, size = 0x1000, scoped, tag = 'scratch operand']
  %s0 = inlined_call_operand.hbm [shape: f32[2], index: 0, kind: input, shape index: {}]
  %s1 = inlined_call_operand.hbm [shape: f32[7,16,128], index: 1, kind: input, shape index: {}]
  %s2 = inlined_call_operand.hbm [shape: f32[7,16,128], index: 2, kind: input, shape index: {}]
  %s3 = inlined_call_operand.vmem [shape: f32[2,1,1], index: 3, kind: output, shape index: {}]
  %s4 = sld [smem:[#allocation0]]
  $region65: #{tpu_custom_call.1} parent=0
    _
  %s6 = ssub.s32 1, %s4
  %s7 = scalar_select 0, %s6, %s4
  $region1: #{tpu_custom_call.1} parent=0
    #allocation3 [shape = 'u8[512]{0}', space=smem, size = 0x200, scoped, tag = 'input window, operand 0, single buffered']
    #allocation4 [shape = 's32[2]{0}', space=sflag, size = 0x8, scoped, tag = 'scoped memory for tpu_custom_call.1']
    #allocation5 [shape = 's32[2]{0}', space=sflag, size = 0x8, scoped, tag = 'scoped memory for tpu_custom_call.1']
    #allocation6 [shape = 'u8[57344]{0}', space=vmem, size = 0xe000, scoped, tag = 'input window, operand 1']
    #allocation7 [shape = 'u8[57344]{0}', space=vmem, size = 0xe000, scoped, tag = 'input window, operand 2']
    #allocation8 [shape = 's32[2]{0}', space=sflag, size = 0x8, scoped, tag = 'scoped memory for tpu_custom_call.1']
    %8 = vsyncpa [#allocation5], 0
    %9 = vsyncpa [#allocation4], 0
    %s10 = scalar_lea.sflag [#allocation4], 1
    %11 = vsyncpa %s10, 0
    %12 = vsyncpa [#allocation8], 0
    %s13 = scalar_lea.sflag [#allocation8], 1
    %14 = vsyncpa %s13, 0
    loop: start=0, step=1, limit=4
    $region2: #{tpu_custom_call.1} parent=1 // loop_pre_header
      _
    $region3: #{tpu_custom_call.1} parent=1 // loop_header
      %s16 = sphi 0, %s20
      %p17 = scmp.ge.s32.totalorder %s16, 4
      %s23 = sphi 0, %s35
      %s24 = sphi 0, %s31
      %s25 = sphi 0, %s23
      %s26 = sphi 0, %s24
      %s27 = sphi 0, %s25
      %s28 = sphi 0, %s26
      %s36 = sphi 0, %s36
      %s38 = sphi 0, %s36
      %s39 = sphi 0, %s38
      %s53 = sphi 0, %s39
      %s61 = sphi 0, %s63
      %s64 = sphi 0, %s61
      %s65 = sphi 0, %s64
      %s81 = sphi 0, %s65
      %s89 = sphi 0, %s91
      %s92 = sphi 0, %s89
      %s93 = sphi 0, %s92
      %s109 = sphi 0, %s93
      %s115 = sphi 0, %s117
      %s118 = sphi 0, %s115
      %s119 = sphi 0, %s118
      %s135 = sphi 0, %s119
    $region4: #{tpu_custom_call.1} parent=1 // loop_header_branch
      %19 = sbr.rel (%p17) target = $region8
    $region5: #{tpu_custom_call.1} parent=1 // loop_body
      %s21 = ssub.s32 %s16, 1
      %s22 = ssub.s32 %s16, 2
      %s29 = sadd.s32 1, %s24
      %p30 = scmp.ge.s32.totalorder %s29, 1
      %s31 = scalar_select %p30, 0, %s29
      %s32 = sadd.s32 1, %s23
      %s33 = scalar_select %p30, %s32, %s23
      %p34 = scmp.ge.s32.totalorder %s33, 2
      %s35 = scalar_select %p34, 0, %s33
      %s37 = sadd.s32 %s36, 1
      %p40 = scmp.eq.s32.totalorder %s16, 1
      %p41 = scmp.ne.s32.totalorder %s36, %s38
      %p42 = scmp.eq.s32.totalorder %s16, 0
      %p43 = por %p41, %p42
      %p44 = scmp.ne.s32.totalorder %s36, %s38
      %p45 = scmp.eq.s32.totalorder %s21, 1
      %p46 = por %p44, %p45
      %p47 = scmp.ne.s32.totalorder %s38, %s39
      %p48 = scmp.eq.s32.totalorder %s21, 0
      %p49 = por %p47, %p48
      %p50 = scmp.ne.s32.totalorder %s38, %s39
      %p51 = scmp.eq.s32.totalorder %s22, 1
      %p52 = por %p50, %p51
      %p54 = scmp.ne.s32.totalorder %s39, %s53
      %p55 = scmp.eq.s32.totalorder %s22, 0
      %p56 = por %p54, %p55
      %s57 = sadd.s32 %s23, %s24
      %s58 = sadd.s32 %s35, %s31
      %s59 = ssub.s32 %s57, %s58
      %p60 = scmp.eq.s32.totalorder %s59, 0
      %s62 = sadd.s32 %s61, 1
      %s63 = scalar_select %p60, %s61, %s62
      %p66 = pneg %p60
      %p67 = scmp.eq.s32.totalorder %s16, 1
      %p68 = por %p66, %p67
      %p69 = scmp.ne.s32.totalorder %s61, %s64
      %p70 = scmp.eq.s32.totalorder %s16, 0
      %p71 = por %p69, %p70
      %p72 = scmp.ne.s32.totalorder %s61, %s64
      %p73 = scmp.eq.s32.totalorder %s21, 1
      %p74 = por %p72, %p73
      %p75 = scmp.ne.s32.totalorder %s64, %s65
      %p76 = scmp.eq.s32.totalorder %s21, 0
      %p77 = por %p75, %p76
      %p78 = scmp.ne.s32.totalorder %s64, %s65
      %p79 = scmp.eq.s32.totalorder %s22, 1
      %p80 = por %p78, %p79
      %p82 = scmp.ne.s32.totalorder %s65, %s81
      %p83 = scmp.eq.s32.totalorder %s22, 0
      %p84 = por %p82, %p83
      %s85 = sadd.s32 %s23, %s24
      %s86 = sadd.s32 %s35, %s31
      %s87 = ssub.s32 %s85, %s86
      %p88 = scmp.eq.s32.totalorder %s87, 0
      %s90 = sadd.s32 %s89, 1
      %s91 = scalar_select %p88, %s89, %s90
      %p94 = pneg %p88
      %p95 = scmp.eq.s32.totalorder %s16, 1
      %p96 = por %p94, %p95
      %p97 = scmp.ne.s32.totalorder %s89, %s92
      %p98 = scmp.eq.s32.totalorder %s16, 0
      %p99 = por %p97, %p98
      %p100 = scmp.ne.s32.totalorder %s89, %s92
      %p101 = scmp.eq.s32.totalorder %s21, 1
      %p102 = por %p100, %p101
      %p103 = scmp.ne.s32.totalorder %s92, %s93
      %p104 = scmp.eq.s32.totalorder %s21, 0
      %p105 = por %p103, %p104
      %p106 = scmp.ne.s32.totalorder %s92, %s93
      %p107 = scmp.eq.s32.totalorder %s22, 1
      %p108 = por %p106, %p107
      %p110 = scmp.ne.s32.totalorder %s93, %s109
      %p111 = scmp.eq.s32.totalorder %s22, 0
      %p112 = por %p110, %p111
      %s113 = ssub.s32 %s23, %s35
      %p114 = scmp.eq.s32.totalorder %s113, 0
      %s116 = sadd.s32 %s115, 1
      %s117 = scalar_select %p114, %s115, %s116
      %p120 = pneg %p114
      %p121 = scmp.eq.s32.totalorder %s16, 1
      %p122 = por %p120, %p121
      %p123 = scmp.ne.s32.totalorder %s115, %s118
      %p124 = scmp.eq.s32.totalorder %s16, 0
      %p125 = por %p123, %p124
      %p126 = scmp.ne.s32.totalorder %s115, %s118
      %p127 = scmp.eq.s32.totalorder %s21, 1
      %p128 = por %p126, %p127
      %p129 = scmp.ne.s32.totalorder %s118, %s119
      %p130 = scmp.eq.s32.totalorder %s21, 0
      %p131 = por %p129, %p130
      %p132 = scmp.ne.s32.totalorder %s118, %s119
      %p133 = scmp.eq.s32.totalorder %s22, 1
      %p134 = por %p132, %p133
      %p136 = scmp.ne.s32.totalorder %s119, %s135
      %p137 = scmp.eq.s32.totalorder %s22, 0
      %p138 = por %p136, %p137
      %p139 = scmp.le.s32.totalorder 1, %s16
      %p140 = scmp.lt.s32.totalorder %s16, 3
      %p141 = pnand %p139, %p140
      %p142 = pneg %p141
      // Predicated region
      $region9: #{tpu_custom_call.1} parent=5 // pred_check
        _
      $region10: #{tpu_custom_call.1} parent=5 // pred_check_branch
        %144 = sbr.rel (%p141) target = $region12
      $region11: #{tpu_custom_call.1} parent=5 // pred_region
        %s145 = ssub.s32 %s16, 1
        // Predicated region
        $region13: #{tpu_custom_call.1} parent=11 // pred_check
          %p146 = pneg %p49
        $region14: #{tpu_custom_call.1} parent=11 // pred_check_branch
          %148 = sbr.rel (%p146) target = $region16
        $region15: #{tpu_custom_call.1} parent=11 // pred_region
          %s150 = ssub.s32 16, 16
          %151 = vsyncadd [#allocation5], %s150
          %154 = dma.hbm_to_smem %s0, 16, [#allocation3], [#allocation5]
        $region16: #{tpu_custom_call.1} parent=11 // pred_fallthru
          _
      $region12: #{tpu_custom_call.1} parent=5 // pred_fallthru
        _
      %p155 = scmp.lt.s32.totalorder %s16, 2
      // Predicated region
      $region17: #{tpu_custom_call.1} parent=5 // pred_check
        %p156 = pneg %p155
      $region18: #{tpu_custom_call.1} parent=5 // pred_check_branch
        %158 = sbr.rel (%p156) target = $region20
      $region19: #{tpu_custom_call.1} parent=5 // pred_region
        // Predicated region
        $region21: #{tpu_custom_call.1} parent=19 // pred_check
          %p159 = pneg %p71
        $region22: #{tpu_custom_call.1} parent=19 // pred_check_branch
          %161 = sbr.rel (%p159) target = $region24
        $region23: #{tpu_custom_call.1} parent=19 // pred_region
          %s162 = sand.u32 %s61, 1
          %s163 = scalar_lea.sflag [#allocation4], %s162
          %s164 = sand.u32 %s61, 1
          %s165 = smul.addr %s164, 56
          %s166 = scalar_lea.vmem [#allocation6], %s165
          %s167 = sadd.s32 %s23, %s24
          %s169 = ssub.s32 896, 896
          %170 = vsyncadd %s163, %s169
          %s171 = smul.addr %s167, 128
          %s172 = scalar_lea.hbm %s1, %s171
          %s173 = sshll.u32 %s166, 4
          %s174 = int_to_ptr.vmem [resolvable:$true] %s173
          %179 = dma.hbm_to_vmem [thread:$0]  %s172, 896, %s174, %s163, 256, 128, 8
        $region24: #{tpu_custom_call.1} parent=19 // pred_fallthru
          _
        // Predicated region
        $region25: #{tpu_custom_call.1} parent=19 // pred_check
          %p180 = pneg %p99
        $region26: #{tpu_custom_call.1} parent=19 // pred_check_branch
          %182 = sbr.rel (%p180) target = $region28
        $region27: #{tpu_custom_call.1} parent=19 // pred_region
          %s183 = sand.u32 %s89, 1
          %s184 = scalar_lea.sflag [#allocation8], %s183
          %s185 = sand.u32 %s89, 1
          %s186 = smul.addr %s185, 56
          %s187 = scalar_lea.vmem [#allocation7], %s186
          %s188 = sadd.s32 %s23, %s24
          %s190 = ssub.s32 896, 896
          %191 = vsyncadd %s184, %s190
          %s192 = smul.addr %s188, 128
          %s193 = scalar_lea.hbm %s2, %s192
          %s194 = sshll.u32 %s187, 4
          %s195 = int_to_ptr.vmem [resolvable:$true] %s194
          %200 = dma.hbm_to_vmem [thread:$0]  %s193, 896, %s195, %s184, 256, 128, 8
        $region28: #{tpu_custom_call.1} parent=19 // pred_fallthru
          _
      $region20: #{tpu_custom_call.1} parent=5 // pred_fallthru
        _
      %p201 = scmp.le.s32.totalorder 1, %s16
      %p202 = scmp.lt.s32.totalorder %s16, 3
      %p203 = pnand %p201, %p202
      %p204 = pneg %p203
      // Predicated region
      $region29: #{tpu_custom_call.1} parent=5 // pred_check
        _
      $region30: #{tpu_custom_call.1} parent=5 // pred_check_branch
        %206 = sbr.rel (%p203) target = $region32
      $region31: #{tpu_custom_call.1} parent=5 // pred_region
        %s207 = ssub.s32 %s16, 1
        // Predicated region
        $region33: #{tpu_custom_call.1} parent=31 // pred_check
          %p208 = pneg %p49
        $region34: #{tpu_custom_call.1} parent=31 // pred_check_branch
          %210 = sbr.rel (%p208) target = $region36
        $region35: #{tpu_custom_call.1} parent=31 // pred_region
          %211 = dma.done [#allocation5], 16
        $region36: #{tpu_custom_call.1} parent=31 // pred_fallthru
          _
        %s212 = sand.u32 %s64, 1
        %s213 = scalar_lea.sflag [#allocation4], %s212
        %s214 = sand.u32 %s64, 1
        %s215 = smul.addr %s214, 56
        %s216 = scalar_lea.vmem [#allocation6], %s215
        // Predicated region
        $region37: #{tpu_custom_call.1} parent=31 // pred_check
          %p217 = pneg %p77
        $region38: #{tpu_custom_call.1} parent=31 // pred_check_branch
          %219 = sbr.rel (%p217) target = $region40
        $region39: #{tpu_custom_call.1} parent=31 // pred_region
          %220 = dma.done %s213, 896
        $region40: #{tpu_custom_call.1} parent=31 // pred_fallthru
          _
        %s221 = sand.u32 %s92, 1
        %s222 = scalar_lea.sflag [#allocation8], %s221
        %s223 = sand.u32 %s92, 1
        %s224 = smul.addr %s223, 56
        %s225 = scalar_lea.vmem [#allocation7], %s224
        // Predicated region
        $region41: #{tpu_custom_call.1} parent=31 // pred_check
          %p226 = pneg %p105
        $region42: #{tpu_custom_call.1} parent=31 // pred_check_branch
          %228 = sbr.rel (%p226) target = $region44
        $region43: #{tpu_custom_call.1} parent=31 // pred_region
          %229 = dma.done %s222, 896
        $region44: #{tpu_custom_call.1} parent=31 // pred_fallthru
          _
        %230 = sfence
        %p231 = pneg %p49
        %p232 = pneg %p46
        %s233 = sand.u32 %s64, 1
        %s234 = scalar_lea.sflag [#allocation4], %s233
        %s235 = sand.u32 %s64, 1
        %s236 = smul.addr %s235, 56
        %s237 = scalar_lea.vmem [#allocation6], %s236
        %p238 = pneg %p77
        %p239 = pneg %p74
        %s240 = sand.u32 %s92, 1
        %s241 = scalar_lea.sflag [#allocation8], %s240
        %s242 = sand.u32 %s92, 1
        %s243 = smul.addr %s242, 56
        %s244 = scalar_lea.vmem [#allocation7], %s243
        %p245 = pneg %p105
        %p246 = pneg %p102
        %p247 = pneg %p131
        %p248 = pneg %p128
        %p249 = scmp.lt.s32.totalorder %s25, 1
        %s250 = scalar_select %p249, %s25, 1
        %s251 = scalar_lea.vmem %s3, %s250
        %s252 = sadd.s32 %s25, %s26
        %s253 = sadd.s32 %s25, %s26
        %p254 = scmp.lt.s32.totalorder %s25, 1
        %s255 = scalar_select %p254, %s25, 1
        %s256 = scalar_lea.vmem %s3, %s255
        %p257 = scmp.eq.s32.totalorder %s26, 0
        // Predicated region
        $region45: #{tpu_custom_call.1} parent=31 // pred_check
          %p258 = pneg %p257
        $region46: #{tpu_custom_call.1} parent=31 // pred_check_branch
          %260 = sbr.rel (%p258) target = $region48
        $region47: #{tpu_custom_call.1} parent=31 // pred_region
          %261 = vst [vmem:[#allocation2] sm:$0xff] 0.0
        $region48: #{tpu_custom_call.1} parent=31 // pred_fallthru
          _
        %v262 = vld [vmem:[%s216] sm:$0xff]
        %s263 = scalar_lea.vmem %s216, 8 [#allocation6]
        %v264 = vld [vmem:[%s263] sm:$0xff]
        %s265 = scalar_lea.vmem %s216, 16 [#allocation6]
        %v266 = vld [vmem:[%s265] sm:$0xff]
        %v267 = vld [vmem:[%s225] sm:$0xff]
        %s268 = scalar_lea.vmem %s225, 8 [#allocation7]
        %v269 = vld [vmem:[%s268] sm:$0xff]
        %s270 = scalar_lea.vmem %s225, 16 [#allocation7]
        %v271 = vld [vmem:[%s270] sm:$0xff]
        %s272 = scalar_lea.vmem %s216, 24 [#allocation6]
        %v273 = vld [vmem:[%s272] sm:$0xff]
        %s274 = scalar_lea.vmem %s216, 32 [#allocation6]
        %v275 = vld [vmem:[%s274] sm:$0xff]
        %s276 = scalar_lea.vmem %s216, 40 [#allocation6]
        %v277 = vld [vmem:[%s276] sm:$0xff]
        %s278 = scalar_lea.vmem %s216, 48 [#allocation6]
        %v279 = vld [vmem:[%s278] sm:$0xff]
        %s280 = scalar_lea.vmem %s225, 24 [#allocation7]
        %v281 = vld [vmem:[%s280] sm:$0xff]
        %s282 = scalar_lea.vmem %s225, 32 [#allocation7]
        %v283 = vld [vmem:[%s282] sm:$0xff]
        %v284 = vsub.f32 0.0, %v283
        %s285 = scalar_lea.vmem %s225, 40 [#allocation7]
        %v286 = vld [vmem:[%s285] sm:$0xff]
        %v287 = vsub.f32 0.0, %v286
        %s288 = scalar_lea.vmem %s225, 48 [#allocation7]
        %v289 = vld [vmem:[%s288] sm:$0xff]
        %v290 = vsub.f32 0.0, %v289
        %v291 = vsub.f32 %v262, %v267
        %v292 = vand.u32 2147483647, %v291
        %v293 = vsub.f32 %v264, %v269
        %v294 = vand.u32 2147483647, %v293
        %v295 = vadd.f32 %v292, %v294
        %v296 = vsub.f32 %v266, %v271
        %v297 = vand.u32 2147483647, %v296
        %v298 = vadd.f32 %v295, %v297
        %v299 = vmul.f32 %v273, %v284
        %v300 = vmul.f32 %v275, %v281
        %v301 = vadd.f32 %v299, %v300
        %v302 = vmul.f32 %v277, %v290
        %v303 = vadd.f32 %v301, %v302
        %v304 = vmul.f32 %v279, %v287
        %v305 = vsub.f32 %v303, %v304
        %v306 = vmul.f32 %v273, %v287
        %v307 = vmul.f32 %v275, %v290
        %v308 = vsub.f32 %v306, %v307
        %v309 = vmul.f32 %v277, %v281
        %v310 = vadd.f32 %v308, %v309
        %v311 = vmul.f32 %v279, %v284
        %v312 = vadd.f32 %v310, %v311
        %v313 = vmul.f32 %v273, %v290
        %v314 = vmul.f32 %v275, %v287
        %v315 = vadd.f32 %v313, %v314
        %v316 = vmul.f32 %v277, %v284
        %v317 = vsub.f32 %v315, %v316
        %v318 = vmul.f32 %v279, %v281
        %v319 = vadd.f32 %v317, %v318
        %v320 = vmul.f32 %v273, %v273
        %v321 = vmul.f32 %v275, %v275
        %v322 = vadd.f32 %v320, %v321
        %v323 = vmul.f32 %v277, %v277
        %v324 = vadd.f32 %v322, %v323
        %v325 = vmul.f32 %v279, %v279
        %v326 = vadd.f32 %v324, %v325
        %v327 = vrsqrt.pop %v326
        %v328 = vand.u32 2147483647, %v305
        %v329 = vand.u32 2147483647, %v312
        %v330 = vadd.f32 %v328, %v329
        %v331 = vand.u32 2147483647, %v319
        %v332 = vadd.f32 %v330, %v331
        %v333 = vmul.f32 %v332, 2.0
        %v334 = vmul.f32 %v333, %v327
        %v335 = vld [vmem:[#allocation2] sm:$0xff]
        %s336 = sld [smem:[#allocation3]]
        %v337 = vstv %s336
        %v338 = vmul.f32 %v337, %v298
        %s339 = sld [smem:[#allocation3 + $0x1]]
        %v340 = vstv %s339
        %v341 = vmul.f32 %v340, %v334
        %v342 = vadd.f32 %v338, %v341
        %v343 = vadd.f32 %v335, %v342
        %344 = vst [vmem:[#allocation2] sm:$0xff] %v343
        // Predicated region
        $region49: #{tpu_custom_call.1} parent=31 // pred_check
          %p345 = pneg %p257
        $region50: #{tpu_custom_call.1} parent=31 // pred_check_branch
          %347 = sbr.rel (%p345) target = $region52
        $region51: #{tpu_custom_call.1} parent=31 // pred_region
          %v348 = vld [vmem:[#allocation2] sm:$0xff]
          %349 = vadd.xlane.f32.xlu0 %v348
          %v350 = vpop.xlane.xlu0 %349
          %v351 = vrot.slane %v350, 4
          %v352 = vadd.f32 %v350, %v351
          %v353 = vrot.slane %v352, 2
          %v354 = vadd.f32 %v352, %v353
          %v355 = vrot.slane %v354, 1
          %v356 = vadd.f32 %v354, %v355
          %s357 = vtos %v356
          %v358 = vstv %s357
          %vm359 = vcmask 0
          %360 = vst.msk [vmem:[%s256] sm:$0x1] %vm359, %v358
        $region52: #{tpu_custom_call.1} parent=31 // pred_fallthru
          _
        %p361 = scmp.lt.s32.totalorder %s25, 1
        %s362 = scalar_select %p361, %s25, 1
        %s363 = scalar_lea.vmem %s3, %s362
        // Predicated region
        $region53: #{tpu_custom_call.1} parent=31 // pred_check
          %p364 = pneg %p128
        $region54: #{tpu_custom_call.1} parent=31 // pred_check_branch
          %366 = sbr.rel (%p364) target = $region56
        $region55: #{tpu_custom_call.1} parent=31 // pred_region
          _
        $region56: #{tpu_custom_call.1} parent=31 // pred_fallthru
          _
      $region32: #{tpu_custom_call.1} parent=5 // pred_fallthru
        _
      %p367 = scmp.le.s32.totalorder 2, %s16
      // Predicated region
      $region57: #{tpu_custom_call.1} parent=5 // pred_check
        %p368 = pneg %p367
      $region58: #{tpu_custom_call.1} parent=5 // pred_check_branch
        %370 = sbr.rel (%p368) target = $region60
      $region59: #{tpu_custom_call.1} parent=5 // pred_region
        %s371 = ssub.s32 %s16, 2
        // Predicated region
        $region61: #{tpu_custom_call.1} parent=59 // pred_check
          %p372 = pneg %p134
        $region62: #{tpu_custom_call.1} parent=59 // pred_check_branch
          %374 = sbr.rel (%p372) target = $region64
        $region63: #{tpu_custom_call.1} parent=59 // pred_region
          %p375 = scmp.lt.s32.totalorder %s27, 1
          %s376 = scalar_select %p375, %s27, 1
          %s377 = scalar_lea.vmem %s3, %s376
        $region64: #{tpu_custom_call.1} parent=59 // pred_fallthru
          _
      $region60: #{tpu_custom_call.1} parent=5 // pred_fallthru
        _
    $region6: #{tpu_custom_call.1} parent=1 // loop_footer
      %s20 = sadd.s32 1, %s16
    $region7: #{tpu_custom_call.1} parent=1 // loop_footer_branch
      %15 = sbr.rel target = $region3
    $region8: #{tpu_custom_call.1} parent=1 // loop_exit
      _
    %378 = vsyncpa [#allocation4], 1
    %s379 = scalar_lea.sflag [#allocation4], 1
    %380 = vsyncpa %s379, 1
    %381 = vsyncpa [#allocation8], 1
    %s382 = scalar_lea.sflag [#allocation8], 1
    %383 = vsyncpa %s382, 1
    %384 = vsyncpa [#allocation5], 1
    %s385 = scalar_lea.sflag [#allocation5], 1
    %386 = vsyncpa %s385, 1

</llo_original>
